<compile_context>
chip_gen: v7x
topology: tpu7x:2x2x1
jax: 0.10.0
libtpu: 0.0.40
codegen_flags: <defaults>
</compile_context>

<pallas_src>
import functools

import jax
import jax.numpy as jnp
from jax.experimental import pallas as pl
from jax.experimental.pallas import tpu as pltpu


def mlp_kernel(x_ref, w1_ref, b1_ref, w2_ref, b2_ref, o_ref):
    # hidden = relu(x @ W1 + b1), f32 accumulation on the MXU.
    h = jnp.dot(x_ref[...], w1_ref[...], preferred_element_type=jnp.float32)
    h = jnp.maximum(h + b1_ref[...], 0.0)          # (1, Hp) broadcasts over rows
    # out = h @ W2 + b2.  Cast activations to W2's storage dtype (bf16 in the
    # mixed-precision path); accumulation stays f32.
    y = jnp.dot(h.astype(w2_ref.dtype), w2_ref[...],
                preferred_element_type=jnp.float32)
    o_ref[...] = (y + b2_ref[...]).astype(o_ref.dtype)


def _round_up(x, m):
    return ((x + m - 1) // m) * m


def _pad2d(a, rows, cols):
    pr, pc = rows - a.shape[0], cols - a.shape[1]
    if pr or pc:
        a = jnp.pad(a, ((0, pr), (0, pc)))
    return a


def prepare_params(w1, b1, w2, b2, compute_dtype=None):
    """One-time (outside the per-call path) weight prep.

    Pads the hidden lane dimension to a multiple of 128 so both matmuls are
    lane-dense on the MXU.  Padded hidden columns of W1/b1 are zero, and the
    matching padded rows of W2 are zero, so results are exact.  Optionally casts
    the weight matrices to `compute_dtype` (e.g. bf16 on v6e/v7x); biases stay
    f32 because the epilogue accumulates in f32.
    """
    F, H = w1.shape
    O = w2.shape[1]
    Hp = _round_up(H, 128)
    wdt = w1.dtype if compute_dtype is None else compute_dtype
    w1p = _pad2d(w1.astype(wdt), F, Hp)
    b1p = _pad2d(b1.astype(jnp.float32).reshape(1, H), 1, Hp)
    w2p = _pad2d(w2.astype(wdt), Hp, O)
    b2p = b2.astype(jnp.float32).reshape(1, O)
    return w1p, b1p, w2p, b2p


@functools.partial(jax.jit, static_argnames=("batch_tile", "compute_dtype"))
def net_forward(x, w1p, b1p, w2p, b2p, *, batch_tile=256, compute_dtype=None):
    """Pallas forward pass of Net: Linear -> ReLU -> Linear.

    x:   (B, n_features)
    w1p: (n_features, Hp)  b1p: (1, Hp)     (Hp = round_up(n_hidden, 128))
    w2p: (Hp, n_output)    b2p: (1, n_output)
    compute_dtype: optional operand dtype (e.g. jnp.bfloat16) for x in the
                   matmuls; accumulation is always f32.
    """
    out_dtype = x.dtype
    B, F = x.shape
    Hp = w1p.shape[1]
    O = w2p.shape[1]

    if compute_dtype is not None:
        x = x.astype(compute_dtype)

    # Batch tile: multiple of 8 (sublane), clamped to the (rounded-up) batch.
    # Default 256 keeps >= 2 grid steps for B > 256 so the two v7x TensorCores
    # can split the batch; the last block may be partial (Pallas masks it).
    TB = min(_round_up(batch_tile, 8), _round_up(B, 8))
    grid = (pl.cdiv(B, TB),)

    x_itemsize = jnp.dtype(x.dtype).itemsize
    w_itemsize = jnp.dtype(w1p.dtype).itemsize
    o_itemsize = jnp.dtype(out_dtype).itemsize

    # VMEM working set: double-buffered streamed x/y tiles, single-buffered
    # resident weights/biases, plus the f32 hidden intermediate (with slack).
    vmem_est = (
        2 * TB * F * x_itemsize            # x tiles (double buffered)
        + 2 * TB * O * o_itemsize          # y tiles (double buffered)
        + (w1p.size + w2p.size) * w_itemsize
        + (b1p.size + b2p.size) * 4
        + 2 * TB * Hp * 4                  # hidden intermediate + temporaries
    )
    vmem_limit = int(min(64 << 20, max(16 << 20, int(vmem_est * 1.5))))

    cost = pl.CostEstimate(
        flops=2 * B * (F * Hp + Hp * O),
        transcendentals=0,
        bytes_accessed=(x.size * x_itemsize
                        + (w1p.size + w2p.size) * w_itemsize
                        + (b1p.size + b2p.size) * 4
                        + B * O * o_itemsize),
    )

    resident = dict(pipeline_mode=pl.Buffered(1))  # constant index_map -> 1 buffer

    return pl.pallas_call(
        mlp_kernel,
        out_shape=jax.ShapeDtypeStruct((B, O), out_dtype),
        grid_spec=pltpu.PrefetchScalarGridSpec(
            num_scalar_prefetch=0,
            grid=grid,
            in_specs=[
                pl.BlockSpec((TB, F), lambda i: (i, 0)),            # streamed x
                pl.BlockSpec((F, Hp), lambda i: (0, 0), **resident),  # W1
                pl.BlockSpec((1, Hp), lambda i: (0, 0), **resident),  # b1
                pl.BlockSpec((Hp, O), lambda i: (0, 0), **resident),  # W2
                pl.BlockSpec((1, O), lambda i: (0, 0), **resident),   # b2
            ],
            out_specs=pl.BlockSpec((TB, O), lambda i: (i, 0)),
        ),
        compiler_params=pltpu.CompilerParams(
            dimension_semantics=("parallel",),
            vmem_limit_bytes=vmem_limit,
        ),
        cost_estimate=cost,
    )(x, w1p, b1p, w2p, b2p)


def init_params(key, n_features, n_hidden, n_output, dtype=jnp.float32):
    """Deterministic init mimicking nn.Linear's uniform(-1/sqrt(fan_in), 1/sqrt(fan_in))."""
    k1, k2, k3, k4 = jax.random.split(key, 4)
    lim1 = 1.0 / jnp.sqrt(jnp.array(n_features, dtype))
    lim2 = 1.0 / jnp.sqrt(jnp.array(n_hidden, dtype))
    w1 = jax.random.uniform(k1, (n_features, n_hidden), dtype, -lim1, lim1)
    b1 = jax.random.uniform(k2, (1, n_hidden), dtype, -lim1, lim1)
    w2 = jax.random.uniform(k3, (n_hidden, n_output), dtype, -lim2, lim2)
    b2 = jax.random.uniform(k4, (1, n_output), dtype, -lim2, lim2)
    return w1, b1, w2, b2


if __name__ == "__main__":
    # Small shapes consistent with the module: Net(n_features=8, n_hidden=32, n_output=4)
    batch, n_features, n_hidden, n_output = 8, 8, 32, 4

    key = jax.random.PRNGKey(0)
    kx, kp = jax.random.split(key)
    x = jax.random.normal(kx, (batch, n_features), dtype=jnp.float32)
    w1, b1, w2, b2 = init_params(kp, n_features, n_hidden, n_output)

    # One-time weight prep (padding to lane-dense hidden dim), then the kernel.
    params = prepare_params(w1, b1, w2, b2)
    out = net_forward(x, *params)
    jax.block_until_ready(out)

    # Pure-JAX reference check (f32 path -> tight tolerance).
    ref = jnp.maximum(x @ w1 + b1, 0.0) @ w2 + b2
    assert out.shape == (batch, n_output)
    assert jnp.allclose(out, ref, atol=1e-5, rtol=1e-5)

    print("KERNEL_OK")
</pallas_src>

<mosaic_0001>
module attributes {stable_mosaic.version = 11 : i64} {
  func.func @mlp_kernel(%arg0: i32, %arg1: memref<8x8xf32, #tpu.memory_space<vmem>>, %arg2: memref<8x128xf32, #tpu.memory_space<vmem>>, %arg3: memref<1x128xf32, #tpu.memory_space<vmem>>, %arg4: memref<128x4xf32, #tpu.memory_space<vmem>>, %arg5: memref<1x4xf32, #tpu.memory_space<vmem>>, %arg6: memref<8x4xf32, #tpu.memory_space<vmem>>) attributes {dimension_semantics = [#tpu.dimension_semantics<parallel>], iteration_bounds = array<i64: 1>, scalar_prefetch = 0 : i64, scratch_operands = 0 : i64, tpu.core_type = #tpu.core_type<tc>, window_params = [{transform_indices = @transform_0, window_bounds = array<i64: 8, 8>}, {pipeline_mode = #tpu.pipeline_mode<synchronous>, transform_indices = @transform_1, window_bounds = array<i64: 8, 128>}, {pipeline_mode = #tpu.pipeline_mode<synchronous>, transform_indices = @transform_2, window_bounds = array<i64: 1, 128>}, {pipeline_mode = #tpu.pipeline_mode<synchronous>, transform_indices = @transform_3, window_bounds = array<i64: 128, 4>}, {pipeline_mode = #tpu.pipeline_mode<synchronous>, transform_indices = @transform_4, window_bounds = array<i64: 1, 4>}, {transform_indices = @transform_5, window_bounds = array<i64: 8, 4>}]} {
    %c0 = arith.constant 0 : index
    %c0_0 = arith.constant 0 : index
    %0 = vector.load %arg1[%c0, %c0_0] : memref<8x8xf32, #tpu.memory_space<vmem>>, vector<8x8xf32>
    %c0_1 = arith.constant 0 : index
    %c0_2 = arith.constant 0 : index
    %1 = vector.load %arg2[%c0_1, %c0_2] : memref<8x128xf32, #tpu.memory_space<vmem>>, vector<8x128xf32>
    %cst = arith.constant dense<0.000000e+00> : vector<8x128xf32>
    %2 = tpu.matmul %0, %1, %cst {dimension_numbers = #tpu.dot_dimension_numbers<[1], [0], [0], [1], [0, 0, 1, 1], [], []>} : vector<8x8xf32>, vector<8x128xf32>, vector<8x128xf32> -> vector<8x128xf32>
    %c0_3 = arith.constant 0 : index
    %c0_4 = arith.constant 0 : index
    %3 = vector.load %arg3[%c0_3, %c0_4] : memref<1x128xf32, #tpu.memory_space<vmem>>, vector<1x128xf32>
    %4 = vector.broadcast %3 : vector<1x128xf32> to vector<8x128xf32>
    %5 = arith.addf %2, %4 : vector<8x128xf32>
    %cst_5 = arith.constant 0.000000e+00 : f32
    %6 = vector.broadcast %cst_5 : f32 to vector<8x128xf32>
    %7 = arith.maximumf %5, %6 : vector<8x128xf32>
    %c0_6 = arith.constant 0 : index
    %c0_7 = arith.constant 0 : index
    %8 = vector.load %arg4[%c0_6, %c0_7] : memref<128x4xf32, #tpu.memory_space<vmem>>, vector<128x4xf32>
    %cst_8 = arith.constant dense<0.000000e+00> : vector<8x4xf32>
    %9 = tpu.matmul %7, %8, %cst_8 {dimension_numbers = #tpu.dot_dimension_numbers<[1], [0], [0], [1], [0, 0, 1, 1], [], []>} : vector<8x128xf32>, vector<128x4xf32>, vector<8x4xf32> -> vector<8x4xf32>
    %c0_9 = arith.constant 0 : index
    %c0_10 = arith.constant 0 : index
    %10 = vector.load %arg5[%c0_9, %c0_10] : memref<1x4xf32, #tpu.memory_space<vmem>>, vector<1x4xf32>
    %11 = vector.broadcast %10 : vector<1x4xf32> to vector<8x4xf32>
    %12 = arith.addf %9, %11 : vector<8x4xf32>
    %c0_11 = arith.constant 0 : index
    %c0_12 = arith.constant 0 : index
    %13 = vector.load %arg6[%c0_11, %c0_12] : memref<8x4xf32, #tpu.memory_space<vmem>>, vector<8x4xf32>
    tpu.vector_store %arg6[%c0_11, %c0_12], %12 {strides = array<i32>} : memref<8x4xf32, #tpu.memory_space<vmem>>, vector<8x4xf32>,
    return
  }
  func.func @transform_0(%arg0: i32) -> (i32, i32) {
    %c0_i32 = arith.constant 0 : i32
    %c0_i32_0 = arith.constant 0 : i32
    return %arg0, %c0_i32 : i32, i32
  }
  func.func @transform_1(%arg0: i32) -> (i32, i32) {
    %c0_i32 = arith.constant 0 : i32
    %c0_i32_0 = arith.constant 0 : i32
    %c0_i32_1 = arith.constant 0 : i32
    return %c0_i32, %c0_i32_0 : i32, i32
  }
  func.func @transform_2(%arg0: i32) -> (i32, i32) {
    %c0_i32 = arith.constant 0 : i32
    %c0_i32_0 = arith.constant 0 : i32
    %c0_i32_1 = arith.constant 0 : i32
    return %c0_i32, %c0_i32_0 : i32, i32
  }
  func.func @transform_3(%arg0: i32) -> (i32, i32) {
    %c0_i32 = arith.constant 0 : i32
    %c0_i32_0 = arith.constant 0 : i32
    %c0_i32_1 = arith.constant 0 : i32
    return %c0_i32, %c0_i32_0 : i32, i32
  }
  func.func @transform_4(%arg0: i32) -> (i32, i32) {
    %c0_i32 = arith.constant 0 : i32
    %c0_i32_0 = arith.constant 0 : i32
    %c0_i32_1 = arith.constant 0 : i32
    return %c0_i32, %c0_i32_0 : i32, i32
  }
  func.func @transform_5(%arg0: i32) -> (i32, i32) {
    %c0_i32 = arith.constant 0 : i32
    %c0_i32_0 = arith.constant 0 : i32
    return %arg0, %c0_i32 : i32, i32
  }
}

</mosaic_0001>

<llo_original>
// kernel: net_forward.1
$region0: #{net_forward.1}
  #allocation0 [shape = 'u32[]', space=smem, size = 0x4, offset = 0x4, fixed_abs, tag = 'smem constant byte address 0x4 - core index']
  #allocation1 [shape = 'u32[144,128]{1,0:T(1,128)}', space=vmem, size = 0x12000, scoped, tag = 'internal scratch']
  %s0 = inlined_call_operand.vmem [shape: f32[8,8], index: 0, kind: input, shape index: {}]
  %s1 = inlined_call_operand.vmem [shape: f32[8,128], index: 1, kind: input, shape index: {}]
  %s2 = inlined_call_operand.vmem [shape: f32[1,128], index: 2, kind: input, shape index: {}]
  %s3 = inlined_call_operand.vmem [shape: f32[128,4], index: 3, kind: input, shape index: {}]
  %s4 = inlined_call_operand.vmem [shape: f32[1,4], index: 4, kind: input, shape index: {}]
  %s5 = inlined_call_operand.vmem [shape: f32[8,4], index: 5, kind: output, shape index: {}]
  %s6 = sld [smem:[#allocation0]]
  $region30: #{net_forward.1} parent=0
    _
  %s8 = ssub.s32 1, %s6
  %s9 = scalar_select 0, %s8, %s6
  // Predicated region
  $region2: #{net_forward.1} parent=0 // pred_check
    _
  $region3: #{net_forward.1} parent=0 // pred_check_branch
    %11 = sbr.rel (0) target = $region5
  $region4: #{net_forward.1} parent=0 // pred_region
    _
  $region5: #{net_forward.1} parent=0 // pred_fallthru
    _
  // Predicated region
  $region6: #{net_forward.1} parent=0 // pred_check
    _
  $region7: #{net_forward.1} parent=0 // pred_check_branch
    %13 = sbr.rel (0) target = $region9
  $region8: #{net_forward.1} parent=0 // pred_region
    _
  $region9: #{net_forward.1} parent=0 // pred_fallthru
    _
  // Predicated region
  $region10: #{net_forward.1} parent=0 // pred_check
    _
  $region11: #{net_forward.1} parent=0 // pred_check_branch
    %15 = sbr.rel (0) target = $region13
  $region12: #{net_forward.1} parent=0 // pred_region
    _
  $region13: #{net_forward.1} parent=0 // pred_fallthru
    _
  // Predicated region
  $region14: #{net_forward.1} parent=0 // pred_check
    _
  $region15: #{net_forward.1} parent=0 // pred_check_branch
    %17 = sbr.rel (0) target = $region17
  $region16: #{net_forward.1} parent=0 // pred_region
    _
  $region17: #{net_forward.1} parent=0 // pred_fallthru
    _
  // Predicated region
  $region18: #{net_forward.1} parent=0 // pred_check
    _
  $region19: #{net_forward.1} parent=0 // pred_check_branch
    %19 = sbr.rel (0) target = $region21
  $region20: #{net_forward.1} parent=0 // pred_region
    _
  $region21: #{net_forward.1} parent=0 // pred_fallthru
    _
  %v20 = vld [vmem:[%s0] sm:$0xff]
  %v21 = vld [vmem:[%s1] sm:$0xff]
  %v22 = vld [vmem:[%s2] sm:$0x1]
  %v24 = vlaneseq
  %v25 = vshrl.u32 %v24, 7
  %v26 = vsub.s32 0, %v25
  %v27 = vrot.slane %v22, %v26
  %vm29 = vcmask 64512
  %v31 = vsel %vm29, %v20, 0
  %33 = vmatprep.subr.mxu0 0.0
  %34 = vmatpush1.msra.mxu0 %v21
  %35 = vmatprep.subr.mxu0 0.0
  %36 = vmatpush1.msra.mxu0 0.0
  %37 = vmatprep.subr.mxu0 0.0
  %38 = vmatpush1.msra.mxu0 0.0
  %39 = vmatprep.subr.mxu0 0.0
  %40 = vmatpush1.msra.mxu0 0.0
  %41 = vmatprep.subr.mxu0 0.0
  %42 = vmatpush1.msra.mxu0 0.0
  %43 = vmatprep.subr.mxu0 0.0
  %44 = vmatpush1.msra.mxu0 0.0
  %45 = vmatprep.subr.mxu0 0.0
  %46 = vmatpush1.msra.mxu0 0.0
  %47 = vmatprep.subr.mxu0 0.0
  %48 = vmatpush1.msra.mxu0 0.0
  %49 = vmatprep.subr.mxu0 0.0
  %50 = vmatpush1.msra.mxu0 0.0
  %51 = vmatprep.subr.mxu0 0.0
  %52 = vmatpush1.msra.mxu0 0.0
  %53 = vmatprep.subr.mxu0 0.0
  %54 = vmatpush1.msra.mxu0 0.0
  %55 = vmatprep.subr.mxu0 0.0
  %56 = vmatpush1.msra.mxu0 0.0
  %57 = vmatprep.subr.mxu0 0.0
  %58 = vmatpush1.msra.mxu0 0.0
  %59 = vmatprep.subr.mxu0 0.0
  %60 = vmatpush1.msra.mxu0 0.0
  %61 = vmatprep.subr.mxu0 0.0
  %62 = vmatpush1.msra.mxu0 0.0
  %63 = vmatprep.subr.mxu0 0.0
  %64 = vmatpush1.msra.mxu0 0.0
  %65 = vmatprep.subr.mxu0 0.0
  %66 = vmatpush1.msra.mxu0 0.0
  %67 = vmatprep.subr.mxu0 0.0
  %68 = vmatpush1.msra.mxu0 0.0
  %69 = vmatprep.subr.mxu0 0.0
  %70 = vmatpush1.msra.mxu0 0.0
  %71 = vmatprep.subr.mxu0 0.0
  %72 = vmatpush1.msra.mxu0 0.0
  %73 = vmatprep.subr.mxu0 0.0
  %74 = vmatpush1.msra.mxu0 0.0
  %75 = vmatprep.subr.mxu0 0.0
  %76 = vmatpush1.msra.mxu0 0.0
  %77 = vmatprep.subr.mxu0 0.0
  %78 = vmatpush1.msra.mxu0 0.0
  %79 = vmatprep.subr.mxu0 0.0
  %80 = vmatpush1.msra.mxu0 0.0
  %81 = vmatprep.subr.mxu0 0.0
  %82 = vmatpush1.msra.mxu0 0.0
  %83 = vmatprep.subr.mxu0 0.0
  %84 = vmatpush1.msra.mxu0 0.0
  %85 = vmatprep.subr.mxu0 0.0
  %86 = vmatpush1.msra.mxu0 0.0
  %87 = vmatprep.subr.mxu0 0.0
  %88 = vmatpush1.msra.mxu0 0.0
  %89 = vmatprep.subr.mxu0 0.0
  %90 = vmatpush1.msra.mxu0 0.0
  %91 = vmatprep.subr.mxu0 0.0
  %92 = vmatpush1.msra.mxu0 0.0
  %93 = vmatprep.subr.mxu0 0.0
  %94 = vmatpush1.msra.mxu0 0.0
  %95 = vmatprep.subr.mxu0 0.0
  %96 = vmatpush1.msra.mxu0 0.0
  %97 = vmatprep.mubr.f32.mxu0 0.0
  %98 = vmatmul.mubr.f32.gmra.mrb[0].mxu0 %v31
  %v99 = vpop.f32.mrb[0].mxu0
  %v100 = vadd.f32 %v27, %v99
  %v101 = vpop.f32.mrb[0].mxu0
  %102 = vdwg.mxu0
  %v103 = vmax.f32 %v100, 0.0
  %v104 = vld [vmem:[%s3] sm:$0xff]
  %v105 = vld [vmem:[%s3 + $0x8] sm:$0xff]
  %v106 = vld [vmem:[%s3 + $0x10] sm:$0xff]
  %v107 = vld [vmem:[%s3 + $0x18] sm:$0xff]
  %v108 = vld [vmem:[%s3 + $0x20] sm:$0xff]
  %v109 = vld [vmem:[%s3 + $0x28] sm:$0xff]
  %v110 = vld [vmem:[%s3 + $0x30] sm:$0xff]
  %v111 = vld [vmem:[%s3 + $0x38] sm:$0xff]
  %v112 = vld [vmem:[%s3 + $0x40] sm:$0xff]
  %v113 = vld [vmem:[%s3 + $0x48] sm:$0xff]
  %v114 = vld [vmem:[%s3 + $0x50] sm:$0xff]
  %v115 = vld [vmem:[%s3 + $0x58] sm:$0xff]
  %v116 = vld [vmem:[%s3 + $0x60] sm:$0xff]
  %v117 = vld [vmem:[%s3 + $0x68] sm:$0xff]
  %v118 = vld [vmem:[%s3 + $0x70] sm:$0xff]
  %v119 = vld [vmem:[%s3 + $0x78] sm:$0xff]
  %v120 = vld [vmem:[%s4] sm:$0x1]
  %v122 = vlaneseq
  %v123 = vshrl.u32 %v122, 7
  %v124 = vsub.s32 0, %v123
  %v125 = vrot.slane %v120, %v124
  %127 = vmatprep.subr.mxu0 0.0
  %128 = vmatpush1.msra.mxu0 %v104
  %129 = vmatprep.subr.mxu0 0.0
  %130 = vmatpush1.msra.mxu0 %v105
  %131 = vmatprep.subr.mxu0 0.0
  %132 = vmatpush1.msra.mxu0 %v106
  %133 = vmatprep.subr.mxu0 0.0
  %134 = vmatpush1.msra.mxu0 %v107
  %135 = vmatprep.subr.mxu0 0.0
  %136 = vmatpush1.msra.mxu0 %v108
  %137 = vmatprep.subr.mxu0 0.0
  %138 = vmatpush1.msra.mxu0 %v109
  %139 = vmatprep.subr.mxu0 0.0
  %140 = vmatpush1.msra.mxu0 %v110
  %141 = vmatprep.subr.mxu0 0.0
  %142 = vmatpush1.msra.mxu0 %v111
  %143 = vmatprep.subr.mxu0 0.0
  %144 = vmatpush1.msra.mxu0 %v112
  %145 = vmatprep.subr.mxu0 0.0
  %146 = vmatpush1.msra.mxu0 %v113
  %147 = vmatprep.subr.mxu0 0.0
  %148 = vmatpush1.msra.mxu0 %v114
  %149 = vmatprep.subr.mxu0 0.0
  %150 = vmatpush1.msra.mxu0 %v115
  %151 = vmatprep.subr.mxu0 0.0
  %152 = vmatpush1.msra.mxu0 %v116
  %153 = vmatprep.subr.mxu0 0.0
  %154 = vmatpush1.msra.mxu0 %v117
  %155 = vmatprep.subr.mxu0 0.0
  %156 = vmatpush1.msra.mxu0 %v118
  %157 = vmatprep.subr.mxu0 0.0
  %158 = vmatpush1.msra.mxu0 %v119
  %159 = vmatprep.subr.mxu0 0.0
  %160 = vmatpush1.msra.mxu0 0.0
  %161 = vmatprep.subr.mxu0 0.0
  %162 = vmatpush1.msra.mxu0 0.0
  %163 = vmatprep.subr.mxu0 0.0
  %164 = vmatpush1.msra.mxu0 0.0
  %165 = vmatprep.subr.mxu0 0.0
  %166 = vmatpush1.msra.mxu0 0.0
  %167 = vmatprep.subr.mxu0 0.0
  %168 = vmatpush1.msra.mxu0 0.0
  %169 = vmatprep.subr.mxu0 0.0
  %170 = vmatpush1.msra.mxu0 0.0
  %171 = vmatprep.subr.mxu0 0.0
  %172 = vmatpush1.msra.mxu0 0.0
  %173 = vmatprep.subr.mxu0 0.0
  %174 = vmatpush1.msra.mxu0 0.0
  %175 = vmatprep.subr.mxu0 0.0
  %176 = vmatpush1.msra.mxu0 0.0
  %177 = vmatprep.subr.mxu0 0.0
  %178 = vmatpush1.msra.mxu0 0.0
  %179 = vmatprep.subr.mxu0 0.0
  %180 = vmatpush1.msra.mxu0 0.0
  %181 = vmatprep.subr.mxu0 0.0
  %182 = vmatpush1.msra.mxu0 0.0
  %183 = vmatprep.subr.mxu0 0.0
  %184 = vmatpush1.msra.mxu0 0.0
  %185 = vmatprep.subr.mxu0 0.0
  %186 = vmatpush1.msra.mxu0 0.0
  %187 = vmatprep.subr.mxu0 0.0
  %188 = vmatpush1.msra.mxu0 0.0
  %189 = vmatprep.subr.mxu0 0.0
  %190 = vmatpush1.msra.mxu0 0.0
  %191 = vmatprep.mubr.f32.mxu0 0.0
  %192 = vmatmul.mubr.f32.gmra.mrb[0].mxu0 %v103
  %v193 = vpop.f32.mrb[0].mxu0
  %v194 = vadd.f32 %v125, %v193
  %v195 = vpop.f32.mrb[0].mxu0
  %196 = vdwg.mxu0
  %vm197 = vcmask 31744
  %198 = vst.msk [vmem:[%s5] sm:$0xff] %vm197, %v194
  // Predicated region
  $region22: #{net_forward.1} parent=0 // pred_check
    _
  $region23: #{net_forward.1} parent=0 // pred_check_branch
    %200 = sbr.rel (0) target = $region25
  $region24: #{net_forward.1} parent=0 // pred_region
    _
  $region25: #{net_forward.1} parent=0 // pred_fallthru
    _
  // Predicated region
  $region26: #{net_forward.1} parent=0 // pred_check
    _
  $region27: #{net_forward.1} parent=0 // pred_check_branch
    %202 = sbr.rel (0) target = $region29
  $region28: #{net_forward.1} parent=0 // pred_region
    _
  $region29: #{net_forward.1} parent=0 // pred_fallthru
    _

</llo_original>
